<compile_context>
chip_gen: v5e
topology: v5e:2x2
jax: 0.10.0
libtpu: 0.0.40
codegen_flags: <defaults>
</compile_context>

<pallas_src>
import jax
import jax.numpy as jnp
from jax import lax
from jax.experimental import pallas as pl
from jax.experimental.pallas import tpu as pltpu


def _round_up(x, m):
    return ((x + m - 1) // m) * m


def _vmem_cap_bytes():
    """Generation-aware VMEM cap with ~8 MiB headroom (56 MiB on v7x, 120 MiB on v5e/v6e)."""
    try:
        cap = int(pltpu.get_tpu_info().vmem_capacity_bytes)
    except Exception:  # API unavailable -> conservative v7x-safe default
        cap = 64 << 20
    return max(cap - (8 << 20), 16 << 20)


# ---------------------------------------------------------------------------
# Path A: resident table + one-hot MXU matmul (training / large batches).
# ---------------------------------------------------------------------------
def _embed_onehot_kernel(idx_ref, table_ref, out_ref):
    # idx_ref:   (TB, 1) int32 effective row indices (token_drop already fused on the host).
    # table_ref: (V, H) embedding table, VMEM-resident (constant block index).
    # out_ref:   (TB, H) output block.
    tb = out_ref.shape[0]
    v = table_ref.shape[0]
    idx = idx_ref[...]                                        # (TB, 1)
    iota = lax.broadcasted_iota(jnp.int32, (tb, v), 1)        # (TB, V)
    onehot = (idx == iota).astype(table_ref.dtype)            # (TB, V)
    # Row gather as an MXU matmul -> one unmasked lane/sublane-dense (TB, H) store.
    # (MXU f32 decomposition may round at ~bf16x3 level; downstream transformer is bf16 anyway.)
    out_ref[...] = jnp.dot(
        onehot, table_ref[...], preferred_element_type=jnp.float32
    ).astype(out_ref.dtype)


def _embed_onehot(eff_idx, table, *, tb):
    B = eff_idx.shape[0]
    V, H = table.shape
    itemsize = jnp.dtype(table.dtype).itemsize

    b_pad = _round_up(B, tb)
    if b_pad != B:
        eff_idx = jnp.pad(eff_idx, (0, b_pad - B))  # padded rows gather row 0; sliced off below
    idx2d = eff_idx.reshape(b_pad, 1)
    num_chunks = b_pad // tb

    # Single-buffer the resident table (constant index_map => fetched once; no second buffer
    # needed). Fall back to default double-buffering on older APIs and budget for it.
    table_index_map = lambda i: (0, 0)
    try:
        table_spec = pl.BlockSpec((V, H), table_index_map, pipeline_mode=pl.Buffered(1))
        table_buffers = 1
    except Exception:
        table_spec = pl.BlockSpec((V, H), table_index_map)
        table_buffers = 2

    table_bytes = V * H * itemsize
    out_block_bytes = tb * H * itemsize
    idx_block_bytes = tb * 4
    onehot_bytes = tb * V * 4
    vmem_need = (
        table_buffers * table_bytes
        + 2 * (out_block_bytes + idx_block_bytes)  # double-buffered out / idx blocks
        + onehot_bytes                             # in-kernel one-hot intermediate
        + (2 << 20)                                # margin
    )
    vmem_limit = int(min(max(vmem_need, 4 << 20), _vmem_cap_bytes()))

    # "parallel" (v7x 2-TC split) only pays when per-core output work exceeds the cost of each
    # core DMA-ing and holding its own copy of the resident table.
    out_bytes = b_pad * H * itemsize
    semantics = (
        ("parallel",) if (num_chunks >= 2 and out_bytes >= 2 * table_bytes) else ("arbitrary",)
    )

    cost = pl.CostEstimate(
        flops=2 * b_pad * V * H,
        transcendentals=0,
        bytes_accessed=table_bytes + b_pad * 4 + b_pad * H * itemsize,
    )

    out = pl.pallas_call(
        _embed_onehot_kernel,
        out_shape=jax.ShapeDtypeStruct((b_pad, H), table.dtype),
        grid=(num_chunks,),
        in_specs=[
            pl.BlockSpec((tb, 1), lambda i: (i, 0)),  # effective indices (VMEM block)
            table_spec,                               # resident embedding table
        ],
        out_specs=pl.BlockSpec((tb, H), lambda i: (i, 0)),
        compiler_params=pltpu.CompilerParams(
            dimension_semantics=semantics,
            vmem_limit_bytes=vmem_limit,
        ),
        cost_estimate=cost,
    )(idx2d, table)
    return out[:B]


# ---------------------------------------------------------------------------
# Path B: small-batch / huge-table row gather via data-dependent index_map.
# Only B rows are DMA'd from HBM (no full-table read).
# ---------------------------------------------------------------------------
def _embed_row_gather_kernel(idx_ref, row_ref, out_ref):
    # idx_ref: scalar-prefetched (B,) indices in SMEM (consumed by the index_map).
    del idx_ref
    out_ref[...] = row_ref[...]


def _embed_row_gather(eff_idx, table):
    B = eff_idx.shape[0]
    V, H = table.shape
    itemsize = jnp.dtype(table.dtype).itemsize

    grid_spec = pltpu.PrefetchScalarGridSpec(
        num_scalar_prefetch=1,  # eff_idx -> SMEM, visible to index_maps
        grid=(B,),
        in_specs=[pl.BlockSpec((1, H), lambda i, idx_ref: (idx_ref[i], 0))],
        out_specs=pl.BlockSpec((1, H), lambda i, idx_ref: (i, 0)),
    )
    cost = pl.CostEstimate(
        flops=0, transcendentals=0, bytes_accessed=2 * B * H * itemsize + B * 4
    )
    return pl.pallas_call(
        _embed_row_gather_kernel,
        out_shape=jax.ShapeDtypeStruct((B, H), table.dtype),
        grid_spec=grid_spec,
        compiler_params=pltpu.CompilerParams(dimension_semantics=("arbitrary",)),
        cost_estimate=cost,
    )(eff_idx, table)


# ---------------------------------------------------------------------------
# Public wrapper.
# ---------------------------------------------------------------------------
def pallas_label_embed(eff_idx, table, *, mode="auto"):
    """out[i, :] = table[eff_idx[i], :].  eff_idx already has token_drop applied."""
    B = eff_idx.shape[0]
    V, H = table.shape
    itemsize = jnp.dtype(table.dtype).itemsize
    # Defensive clamp against OOB rows (a genuine misuse is rejected loudly in LabelEmbedder).
    eff_idx = jnp.clip(eff_idx.astype(jnp.int32), 0, V - 1)

    table_bytes = V * H * itemsize
    if mode == "auto":
        # Crossover: per-row gather wins when B grid-step overheads (~0.35 us each) cost less
        # than streaming the whole table from HBM, or when the resident table would not fit
        # the VMEM budget.
        table_fits = 2 * table_bytes + (4 << 20) <= _vmem_cap_bytes()
        small_b = B * 280_000 < table_bytes
        mode = "gather" if (small_b or not table_fits) else "onehot"
        # TODO(synk): for v7x with f32 tables > ~28 MiB, tile the resident table along H
        # (second grid axis, (V, TH) blocks) instead of falling back to per-row gather.

    if mode == "gather":
        return _embed_row_gather(eff_idx, table)

    # one-hot MXU path: big chunks; single grid step for typical label-embedding batch sizes.
    tb = _round_up(B, 8) if B <= 256 else 256
    return _embed_onehot(eff_idx, table, tb=tb)


class LabelEmbedder:
    """JAX/Pallas port of the PyTorch LabelEmbedder (token_drop + embedding gather)."""

    def __init__(self, num_classes, hidden_size, dropout_prob, param_key,
                 table_dtype=jnp.float32):
        self.num_classes = num_classes
        self.hidden_size = hidden_size
        self.dropout_prob = dropout_prob
        use_cfg_embedding = int(dropout_prob > 0)
        # nn.Embedding default init ~ N(0, 1); deterministic synthetic init here.
        # table_dtype=jnp.bfloat16 halves HBM traffic / VMEM residency (recommended on v5e).
        self.embedding_table = jax.random.normal(
            param_key, (num_classes + use_cfg_embedding, hidden_size), dtype=jnp.float32
        ).astype(table_dtype)

    def __call__(self, labels, train, drop_key=None, force_drop_ids=None, mode="auto"):
        labels = labels.astype(jnp.int32)
        B = labels.shape[0]
        use_dropout = self.dropout_prob > 0
        if force_drop_ids is not None and not use_dropout:
            # Table has no CFG row; PyTorch would raise an index error. Fail loudly instead
            # of silently clamping dropped labels to the last real class.
            raise ValueError("force_drop_ids requires dropout_prob > 0 (no CFG embedding row)")
        if (train and use_dropout) or (force_drop_ids is not None):
            if force_drop_ids is None:
                drop_ids = jax.random.uniform(drop_key, (B,)) < self.dropout_prob
            else:
                drop_ids = force_drop_ids == 1
            eff_idx = jnp.where(drop_ids, jnp.int32(self.num_classes), labels)
        else:
            eff_idx = labels
        emb = pallas_label_embed(eff_idx, self.embedding_table, mode=mode)
        return emb[:, None, :]  # unsqueeze(1) -> (B, 1, hidden_size)


if __name__ == "__main__":
    num_classes = 10
    hidden_size = 32
    dropout_prob = 0.1
    batch = 8

    key = jax.random.PRNGKey(0)
    k_param, k_labels, k_drop = jax.random.split(key, 3)

    embedder = LabelEmbedder(num_classes, hidden_size, dropout_prob, k_param)
    labels = jax.random.randint(k_labels, (batch,), 0, num_classes, dtype=jnp.int32)
    ref = jnp.take(embedder.embedding_table, labels, axis=0)[:, None, :]

    # Tolerance for the one-hot MXU path (f32 matmul decomposition may round slightly);
    # rows of N(0,1) embeddings differ by O(1), so wrong-row selection would still fail.
    TOL = dict(rtol=5e-2, atol=5e-2)

    # Eval mode (no token drop): both kernel variants + auto dispatch.
    out_onehot = jax.block_until_ready(embedder(labels, train=False, mode="onehot"))
    assert out_onehot.shape == (batch, 1, hidden_size)
    assert jnp.allclose(out_onehot, ref, **TOL), "onehot path mismatch vs reference gather"

    out_gather = jax.block_until_ready(embedder(labels, train=False, mode="gather"))
    assert jnp.allclose(out_gather, ref), "gather path mismatch vs reference gather"

    out_auto = jax.block_until_ready(embedder(labels, train=False))
    assert jnp.allclose(out_auto, ref, **TOL), "auto path mismatch vs reference gather"

    # Train mode with random CFG label dropout: every row must match either its own label's
    # embedding or the CFG embedding (row num_classes).
    out_train = jax.block_until_ready(embedder(labels, train=True, drop_key=k_drop))
    assert out_train.shape == (batch, 1, hidden_size)
    assert bool(jnp.all(jnp.isfinite(out_train)))
    cfg_row = embedder.embedding_table[num_classes][None, None, :]
    match_label = jnp.all(jnp.abs(out_train - ref) < 5e-2, axis=-1)
    match_cfg = jnp.all(jnp.abs(out_train - cfg_row) < 5e-2, axis=-1)
    assert bool(jnp.all(match_label | match_cfg)), "train-mode rows not label/CFG embeddings"

    # Forced-drop path (force_drop_ids == 1 -> CFG embedding at index num_classes).
    force_drop_ids = jnp.array([1, 0, 1, 0, 0, 0, 1, 0], dtype=jnp.int32)
    out_forced = jax.block_until_ready(
        embedder(labels, train=False, force_drop_ids=force_drop_ids)
    )
    dropped = jnp.where(force_drop_ids == 1, num_classes, labels)
    ref_forced = jnp.take(embedder.embedding_table, dropped, axis=0)[:, None, :]
    assert jnp.allclose(out_forced, ref_forced, **TOL), "forced-drop mismatch vs reference"

    # Non-multiple-of-8 batch exercises the padding / slicing path of the one-hot variant.
    labels_odd = labels[:5]
    out_odd = jax.block_until_ready(embedder(labels_odd, train=False, mode="onehot"))
    ref_odd = jnp.take(embedder.embedding_table, labels_odd, axis=0)[:, None, :]
    assert out_odd.shape == (5, 1, hidden_size)
    assert jnp.allclose(out_odd, ref_odd, **TOL), "padded-batch mismatch vs reference gather"

    print("KERNEL_OK")
</pallas_src>

<mosaic_0001>
module attributes {stable_mosaic.version = 11 : i64} {
  func.func @_embed_onehot_kernel(%arg0: i32, %arg1: memref<8x1xi32, #tpu.memory_space<vmem>>, %arg2: memref<11x32xf32, #tpu.memory_space<vmem>>, %arg3: memref<8x32xf32, #tpu.memory_space<vmem>>) attributes {dimension_semantics = [#tpu.dimension_semantics<arbitrary>], iteration_bounds = array<i64: 1>, scalar_prefetch = 0 : i64, scratch_operands = 0 : i64, tpu.core_type = #tpu.core_type<tc>, window_params = [{transform_indices = @transform_0, window_bounds = array<i64: 8, 1>}, {pipeline_mode = #tpu.pipeline_mode<synchronous>, transform_indices = @transform_1, window_bounds = array<i64: 11, 32>}, {transform_indices = @transform_2, window_bounds = array<i64: 8, 32>}]} {
    %c0 = arith.constant 0 : index
    %c0_0 = arith.constant 0 : index
    %0 = vector.load %arg1[%c0, %c0_0] : memref<8x1xi32, #tpu.memory_space<vmem>>, vector<8x1xi32>
    %1 = tpu.iota {dimensions = array<i32: 1>} : vector<8x11xi32>
    %2 = vector.broadcast %0 : vector<8x1xi32> to vector<8x11xi32>
    %3 = arith.cmpi eq, %2, %1 : vector<8x11xi32>
    %4 = arith.extui %3 : vector<8x11xi1> to vector<8x11xi32>
    %5 = arith.sitofp %4 : vector<8x11xi32> to vector<8x11xf32>
    %c0_1 = arith.constant 0 : index
    %c0_2 = arith.constant 0 : index
    %6 = vector.load %arg2[%c0_1, %c0_2] : memref<11x32xf32, #tpu.memory_space<vmem>>, vector<11x32xf32>
    %cst = arith.constant dense<0.000000e+00> : vector<8x32xf32>
    %7 = tpu.matmul %5, %6, %cst {dimension_numbers = #tpu.dot_dimension_numbers<[1], [0], [0], [1], [0, 0, 1, 1], [], []>} : vector<8x11xf32>, vector<11x32xf32>, vector<8x32xf32> -> vector<8x32xf32>
    %c0_3 = arith.constant 0 : index
    %c0_4 = arith.constant 0 : index
    %8 = vector.load %arg3[%c0_3, %c0_4] : memref<8x32xf32, #tpu.memory_space<vmem>>, vector<8x32xf32>
    tpu.vector_store %arg3[%c0_3, %c0_4], %7 {strides = array<i32>} : memref<8x32xf32, #tpu.memory_space<vmem>>, vector<8x32xf32>,
    return
  }
  func.func @transform_0(%arg0: i32) -> (i32, i32) {
    %c0_i32 = arith.constant 0 : i32
    %c0_i32_0 = arith.constant 0 : i32
    return %arg0, %c0_i32 : i32, i32
  }
  func.func @transform_1(%arg0: i32) -> (i32, i32) {
    %c0_i32 = arith.constant 0 : i32
    %c0_i32_0 = arith.constant 0 : i32
    %c0_i32_1 = arith.constant 0 : i32
    return %c0_i32, %c0_i32_0 : i32, i32
  }
  func.func @transform_2(%arg0: i32) -> (i32, i32) {
    %c0_i32 = arith.constant 0 : i32
    %c0_i32_0 = arith.constant 0 : i32
    return %arg0, %c0_i32 : i32, i32
  }
}

</mosaic_0001>

<llo_original>
// kernel: tpu_custom_call.1
$region0: #{tpu_custom_call.1}
  #allocation0 [shape = 'u32[]', space=smem, size = 0x4, offset = 0x4, fixed_abs, tag = 'smem constant byte address 0x4 - core index']
  #allocation1 [shape = 'u32[72,128]{1,0:T(1,128)}', space=vmem, size = 0x9000, scoped, tag = 'internal scratch']
  %s0 = inlined_call_operand.vmem [shape: s32[8,1], index: 0, kind: input, shape index: {}]
  %s1 = inlined_call_operand.hbm [shape: f32[11,32], index: 1, kind: input, shape index: {}]
  %s2 = inlined_call_operand.hbm [shape: f32[8,32], index: 2, kind: output, shape index: {}]
  %s3 = sld [smem:[#allocation0]]
  $region22: #{tpu_custom_call.1} parent=0
    _
  %s5 = ssub.s32 1, %s3
  %s6 = scalar_select 0, %s5, %s3
  $region1: #{tpu_custom_call.1} parent=0
    #allocation2 [shape = 'u8[8192]{0}', space=vmem, size = 0x2000, scoped, tag = 'input window, operand 1, single buffered']
    #allocation3 [shape = 's32[1]{0}', space=sflag, size = 0x4, scoped, tag = 'scoped memory for tpu_custom_call.1']
    #allocation4 [shape = 's32[1]{0}', space=sflag, size = 0x4, scoped, tag = 'scoped memory for tpu_custom_call.1']
    #allocation5 [shape = 'u8[4096]{0}', space=vmem, size = 0x1000, scoped, tag = 'output window, operand 0, single buffered']
    %7 = vsyncpa [#allocation3], 0
    %8 = vsyncpa [#allocation4], 0
    // Predicated region
    $region2: #{tpu_custom_call.1} parent=1 // pred_check
      _
    $region3: #{tpu_custom_call.1} parent=1 // pred_check_branch
      %10 = sbr.rel (0) target = $region5
    $region4: #{tpu_custom_call.1} parent=1 // pred_region
      _
    $region5: #{tpu_custom_call.1} parent=1 // pred_fallthru
      _
    // Predicated region
    $region6: #{tpu_custom_call.1} parent=1 // pred_check
      _
    $region7: #{tpu_custom_call.1} parent=1 // pred_check_branch
      %12 = sbr.rel (0) target = $region9
    $region8: #{tpu_custom_call.1} parent=1 // pred_region
      %14 = vsyncadd [#allocation3], 0
      %s15 = sshll.u32 %s1, 4
      %s16 = int_to_ptr.hbm [resolvable:$true] %s15
      %s17 = sshll.u32 [#allocation2], 4
      %s18 = int_to_ptr.vmem [resolvable:$true] %s17
      %23 = dma.hbm_to_vmem [thread:$0]  %s16, 256, %s18, [#allocation3], 128, 128, 8
    $region9: #{tpu_custom_call.1} parent=1 // pred_fallthru
      _
    // Predicated region
    $region10: #{tpu_custom_call.1} parent=1 // pred_check
      _
    $region11: #{tpu_custom_call.1} parent=1 // pred_check_branch
      %25 = sbr.rel (0) target = $region13
    $region12: #{tpu_custom_call.1} parent=1 // pred_region
      %27 = dma.done [#allocation3], 256
    $region13: #{tpu_custom_call.1} parent=1 // pred_fallthru
      _
    %v28 = vld [vmem:[%s0] sm:$0xff]
    %v29 = vlaneseq
    %v30 = vand.u32 %v29, 127
    %31 = vset.pattern.permute.xlu0 0
    %32 = vperm.xlu0 %31, %v28
    %v33 = vpop.permute.xlu0 %32
    %vm34 = vcmp.eq.s32.totalorder %v33, %v30
    %v35 = vsel %vm34, 1, 0
    %v36 = vcvt.s32.f32 %v35
    %v37 = vld [vmem:[#allocation2] sm:$0xff]
    %v38 = vld [vmem:[#allocation2 + $0x8] sm:$0x7]
    %vm39 = vcmask 89088
    %v41 = vsel %vm39, %v36, 0
    %vm43 = vcmask 1042432
    %v45 = vsel %vm43, %v38, 0
    %47 = vmatpush.msra.mxu0 0.0
    %48 = vmatpush.msra.mxu0 0.0
    %49 = vmatpush.msra.mxu0 0.0
    %50 = vmatpush.msra.mxu0 0.0
    %51 = vmatpush.msra.mxu0 0.0
    %52 = vmatpush.msra.mxu0 0.0
    %53 = vmatpush.msra.mxu0 0.0
    %54 = vmatpush.msra.mxu0 0.0
    %55 = vmatpush.msra.mxu0 0.0
    %56 = vmatpush.msra.mxu0 0.0
    %57 = vmatpush.msra.mxu0 0.0
    %58 = vmatpush.msra.mxu0 0.0
    %59 = vmatpush.msra.mxu0 0.0
    %60 = vmatpush.msra.mxu0 0.0
    %61 = vmatpush.msra.mxu0 %v45
    %62 = vmatpush.msra.mxu0 %v37
    %63 = vmatmul.f32.gmra.mxu0 %v41
    %v64 = vpop.f32.mrf.mxu0
    %v65 = vadd.f32 0.0, %v64
    %66 = vdwg.mxu0
    %vm67 = vcmask 261120
    %68 = vst.msk [vmem:[#allocation5] sm:$0xff] %vm67, %v65
    // Predicated region
    $region14: #{tpu_custom_call.1} parent=1 // pred_check
      _
    $region15: #{tpu_custom_call.1} parent=1 // pred_check_branch
      %70 = sbr.rel (0) target = $region17
    $region16: #{tpu_custom_call.1} parent=1 // pred_region
      %72 = vsyncadd [#allocation4], 0
      %s74 = sshll.u32 [#allocation5], 4
      %s75 = int_to_ptr.vmem [resolvable:$true] %s74
      %s76 = sshll.u32 %s2, 4
      %s77 = int_to_ptr.hbm [resolvable:$true] %s76
      %79 = dma.vmem_to_hbm [thread:$0]  %s75, 128, %s77, [#allocation4]
    $region17: #{tpu_custom_call.1} parent=1 // pred_fallthru
      _
    // Predicated region
    $region18: #{tpu_custom_call.1} parent=1 // pred_check
      _
    $region19: #{tpu_custom_call.1} parent=1 // pred_check_branch
      %81 = sbr.rel (0) target = $region21
    $region20: #{tpu_custom_call.1} parent=1 // pred_region
      %83 = dma.done [#allocation4], 128
    $region21: #{tpu_custom_call.1} parent=1 // pred_fallthru
      _
    %84 = vsyncpa [#allocation3], 1
    %85 = vsyncpa [#allocation4], 1

</llo_original>
